<compile_context>
chip_gen: v6e
topology: v6e:2x2x1
jax: 0.10.0
libtpu: 0.0.40
codegen_flags: <defaults>
</compile_context>

<pallas_src>
import jax
import jax.numpy as jnp
from jax import lax
from jax.experimental import pallas as pl
from jax.experimental.pallas import tpu as pltpu


def _round_up(x, m):
    return ((x + m - 1) // m) * m


def _vmem_capacity_bytes():
    try:
        return int(pltpu.get_tpu_info().vmem_capacity_bytes)
    except Exception:
        return 64 << 20  # conservative (v7x) fallback


def _mishglu_kernel(x_ref, xx_ref, tmk_ref, tmr_ref, wa_ref, wb_ref, wv_ref,
                    o_ref, acc_ref, xa_ref, xb_ref):
    f = pl.program_id(1)

    # Hoisted out of the F reduction loop: time-mix interpolation (f32) + bf16 cast,
    # written once per row tile into VMEM scratch and reused for every f-step.
    @pl.when(f == 0)
    def _():
        acc_ref[...] = jnp.zeros_like(acc_ref)
        x = x_ref[...].astype(jnp.float32)        # (tq, C)
        xx = xx_ref[...].astype(jnp.float32)      # (tq, C), already time-shifted
        tmk = tmk_ref[...].astype(jnp.float32)    # (1, C), broadcasts over tq
        tmr = tmr_ref[...].astype(jnp.float32)    # (1, C)
        xa_ref[...] = (x * tmk + xx * (1.0 - tmk)).astype(jnp.bfloat16)
        xb_ref[...] = (x * tmr + xx * (1.0 - tmr)).astype(jnp.bfloat16)

    # Canonical (M,K)x(K,N) contractions — weights pre-transposed in the wrapper.
    dn = (((1,), (0,)), ((), ()))
    a = lax.dot_general(xa_ref[...], wa_ref[...], dn,
                        preferred_element_type=jnp.float32)   # (tq, tf)
    b = lax.dot_general(xb_ref[...], wb_ref[...], dn,
                        preferred_element_type=jnp.float32)   # (tq, tf)

    # mish(b) = b * tanh(softplus(b));  tanh(softplus(b)) = ((1+e^b)^2-1)/((1+e^b)^2+1)
    # -> one exp (EUP) + one approx reciprocal (EUP), PyTorch threshold=20 fast path.
    e = jnp.exp(jnp.minimum(b, 20.0))
    t2 = (1.0 + e) * (1.0 + e)
    tanh_sp = (t2 - 1.0) * pl.reciprocal(t2 + 1.0, approx=True)
    mish_b = jnp.where(b > 20.0, b, b * tanh_sp)
    gated = (a * mish_b).astype(jnp.bfloat16)                  # (tq, tf)

    # out += gated @ Wv_t tile  (tf, C), canonical contraction, f32 accumulation.
    acc_ref[...] += lax.dot_general(gated, wv_ref[...], dn,
                                    preferred_element_type=jnp.float32)  # (tq, C)

    @pl.when(f == pl.num_programs(1) - 1)
    def _():
        o_ref[...] = acc_ref[...].astype(o_ref.dtype)


def mishglu_forward(x, time_mix_k, time_mix_r, w_aa, w_bb, w_value,
                    *, tq=None, tf=None):
    """x: (B, T, C); time_mix_*: (1, 1, C); w_aa/w_bb: (F, C); w_value: (C, F)."""
    B, T, C = x.shape
    F = w_aa.shape[0]
    BT = B * T
    out_dtype = x.dtype
    act_dtype = jnp.bfloat16

    vmem_cap = _vmem_capacity_bytes()

    # Row tile: must exceed the chip's MXU/HBM flops-per-byte ratio to be MXU-bound
    # (~240 v5e, ~680 v6e, ~310/TC v7x). v6e/v5e (128 MiB VMEM) -> 768; v7x (64 MiB) -> 512.
    if tq is None:
        target = 768 if vmem_cap > (80 << 20) else 512
        n_blocks = max(1, -(-BT // target))                 # cdiv
        tq = min(target, _round_up(-(-BT // n_blocks), 8))  # minimize padding waste
    # F tile: largest standard divisor of F, else the full F.
    if tf is None:
        tf = F
        for cand in (512, 256, 128):
            if F % cand == 0:
                tf = cand
                break
    assert F % tf == 0, "F must be divisible by the F tile size"

    BT_pad = _round_up(BT, tq)

    # Time shift xx[t] = x[t-1], xx[0] = 0 (per batch), built in the wrapper so the
    # flattened row axis can be tiled without halo handling in the kernel.
    # TODO(synk): derive the shift in-kernel (Element-offset BlockSpec + pl.when zero
    # fill) to drop the extra (B,T,C) HBM write+read on bandwidth-limited configs.
    xx = jnp.concatenate([jnp.zeros((B, 1, C), x.dtype), x[:, :-1, :]], axis=1)

    x_flat = x.reshape(BT, C).astype(act_dtype)
    xx_flat = xx.reshape(BT, C).astype(act_dtype)
    if BT_pad != BT:
        pad = BT_pad - BT
        x_flat = jnp.pad(x_flat, ((0, pad), (0, 0)))
        xx_flat = jnp.pad(xx_flat, ((0, pad), (0, 0)))

    tmk = time_mix_k.reshape(1, C).astype(jnp.float32)
    tmr = time_mix_r.reshape(1, C).astype(jnp.float32)

    # One-time bf16 cast + transpose so every in-kernel matmul is a clean (M,K)x(K,N).
    # (In a real model, do this once at parameter-load time, not per call.)
    wa_t = w_aa.T.astype(jnp.bfloat16)      # (C, F)
    wb_t = w_bb.T.astype(jnp.bfloat16)      # (C, F)
    wv_t = w_value.T.astype(jnp.bfloat16)   # (F, C)

    grid = (BT_pad // tq, F // tf)

    # VMEM working set: double-buffered blocks + resident scratch.
    blk_bytes = (
        2 * (tq * C * 2)        # x, xx tiles (bf16)
        + 2 * (C * 4)           # tmk, tmr (f32)
        + 2 * (C * tf * 2)      # wa_t, wb_t tiles (bf16)
        + (tf * C * 2)          # wv_t tile (bf16)
        + (tq * C * out_dtype.itemsize if hasattr(out_dtype, "itemsize")
           else tq * C * jnp.dtype(out_dtype).itemsize)   # output tile
    )
    scratch_bytes = tq * C * 4 + 2 * (tq * C * 2)          # f32 acc + 2x bf16 xa/xb
    vmem_limit = int(max(32 << 20,
                         min(2 * blk_bytes + scratch_bytes + (4 << 20),
                             vmem_cap - (8 << 20))))

    out_flat = pl.pallas_call(
        _mishglu_kernel,
        out_shape=jax.ShapeDtypeStruct((BT_pad, C), out_dtype),
        grid_spec=pltpu.PrefetchScalarGridSpec(
            num_scalar_prefetch=0,
            grid=grid,
            in_specs=[
                pl.BlockSpec((tq, C), lambda r, f: (r, 0)),   # x (flattened rows)
                pl.BlockSpec((tq, C), lambda r, f: (r, 0)),   # xx (time-shifted)
                pl.BlockSpec((1, C),  lambda r, f: (0, 0)),   # time_mix_k
                pl.BlockSpec((1, C),  lambda r, f: (0, 0)),   # time_mix_r
                pl.BlockSpec((C, tf), lambda r, f: (0, f)),   # w_aa^T tile (C, tf)
                pl.BlockSpec((C, tf), lambda r, f: (0, f)),   # w_bb^T tile (C, tf)
                pl.BlockSpec((tf, C), lambda r, f: (f, 0)),   # w_value^T tile (tf, C)
            ],
            out_specs=pl.BlockSpec((tq, C), lambda r, f: (r, 0)),
            scratch_shapes=[
                pltpu.VMEM((tq, C), jnp.float32),    # f32 accumulator
                pltpu.VMEM((tq, C), jnp.bfloat16),   # xa (hoisted time-mix)
                pltpu.VMEM((tq, C), jnp.bfloat16),   # xb (hoisted time-mix)
            ],
        ),
        compiler_params=pltpu.CompilerParams(
            dimension_semantics=("parallel", "arbitrary"),
            vmem_limit_bytes=vmem_limit,
        ),
    )(x_flat, xx_flat, tmk, tmr, wa_t, wb_t, wv_t)

    return out_flat[:BT].reshape(B, T, C)


def _reference(x, time_mix_k, time_mix_r, w_aa, w_bb, w_value):
    B, T, C = x.shape
    xx = jnp.concatenate([jnp.zeros((B, 1, C), x.dtype), x[:, :-1, :]], axis=1)
    tmk = time_mix_k.reshape(1, 1, C)
    tmr = time_mix_r.reshape(1, 1, C)
    xa = x * tmk + xx * (1.0 - tmk)
    xb = x * tmr + xx * (1.0 - tmr)
    a = xa @ w_aa.T
    b = xb @ w_bb.T
    mish = b * jnp.tanh(jnp.log1p(jnp.exp(b)))
    return (a * mish) @ w_value.T


if __name__ == "__main__":
    # Small synthetic config (mirrors module __init__ shapes)
    n_layer, layer_id = 4, 1
    n_embd, dim_ffn = 32, 64
    B, T = 2, 8

    # Deterministic parameter init
    ratio_1_to_almost0 = 1.0 - layer_id / n_layer
    pos = jnp.arange(n_embd, dtype=jnp.float32) / n_embd          # i / n_embd
    time_mix_k = jnp.power(pos, ratio_1_to_almost0).reshape(1, 1, n_embd)
    time_mix_r = jnp.power(pos, ratio_1_to_almost0).reshape(1, 1, n_embd)

    key = jax.random.PRNGKey(0)
    k1, k2, k3, kx = jax.random.split(key, 4)
    # nn.Linear default init: U(-1/sqrt(in_features), 1/sqrt(in_features))
    w_aa = jax.random.uniform(k1, (dim_ffn, n_embd), jnp.float32,
                              -1.0 / jnp.sqrt(n_embd), 1.0 / jnp.sqrt(n_embd))
    w_bb = jax.random.uniform(k2, (dim_ffn, n_embd), jnp.float32,
                              -1.0 / jnp.sqrt(n_embd), 1.0 / jnp.sqrt(n_embd))
    w_value = jax.random.uniform(k3, (n_embd, dim_ffn), jnp.float32,
                                 -1.0 / jnp.sqrt(dim_ffn), 1.0 / jnp.sqrt(dim_ffn))

    x = jax.random.normal(kx, (B, T, n_embd), jnp.float32)

    out = mishglu_forward(x, time_mix_k, time_mix_r, w_aa, w_bb, w_value)
    out = jax.block_until_ready(out)

    ref = _reference(x, time_mix_k, time_mix_r, w_aa, w_bb, w_value)
    assert out.shape == (B, T, n_embd)
    # bf16 MXU operands / bf16 activations -> relaxed tolerance vs. the f32 reference
    assert jnp.allclose(out, ref, atol=3e-2, rtol=3e-2), float(jnp.max(jnp.abs(out - ref)))

    print("KERNEL_OK")
</pallas_src>

<mosaic_0001>
module attributes {stable_mosaic.version = 11 : i64} {
  func.func @_mishglu_kernel(%arg0: i32, %arg1: i32, %arg2: memref<16x32xbf16, #tpu.memory_space<vmem>>, %arg3: memref<16x32xbf16, #tpu.memory_space<vmem>>, %arg4: memref<1x32xf32, #tpu.memory_space<vmem>>, %arg5: memref<1x32xf32, #tpu.memory_space<vmem>>, %arg6: memref<32x64xbf16, #tpu.memory_space<vmem>>, %arg7: memref<32x64xbf16, #tpu.memory_space<vmem>>, %arg8: memref<64x32xbf16, #tpu.memory_space<vmem>>, %arg9: memref<16x32xf32, #tpu.memory_space<vmem>>, %arg10: memref<16x32xf32, #tpu.memory_space<vmem>>, %arg11: memref<16x32xbf16, #tpu.memory_space<vmem>>, %arg12: memref<16x32xbf16, #tpu.memory_space<vmem>>) attributes {dimension_semantics = [#tpu.dimension_semantics<parallel>, #tpu.dimension_semantics<arbitrary>], iteration_bounds = array<i64: 1, 1>, scalar_prefetch = 0 : i64, scratch_operands = 3 : i64, tpu.core_type = #tpu.core_type<tc>, window_params = [{transform_indices = @transform_0, window_bounds = array<i64: 16, 32>}, {transform_indices = @transform_1, window_bounds = array<i64: 16, 32>}, {pipeline_mode = #tpu.pipeline_mode<synchronous>, transform_indices = @transform_2, window_bounds = array<i64: 1, 32>}, {pipeline_mode = #tpu.pipeline_mode<synchronous>, transform_indices = @transform_3, window_bounds = array<i64: 1, 32>}, {transform_indices = @transform_4, window_bounds = array<i64: 32, 64>}, {transform_indices = @transform_5, window_bounds = array<i64: 32, 64>}, {transform_indices = @transform_6, window_bounds = array<i64: 64, 32>}, {transform_indices = @transform_7, window_bounds = array<i64: 16, 32>}]} {
    %c0_i32 = arith.constant 0 : i32
    %0 = arith.cmpi eq, %arg1, %c0_i32 : i32
    %1 = arith.extui %0 : i1 to i32
    %c0_i32_0 = arith.constant 0 : i32
    %2 = arith.cmpi ne, %1, %c0_i32_0 : i32
    scf.if %2 {
      %cst_24 = arith.constant 0.000000e+00 : f32
      %37 = vector.broadcast %cst_24 : f32 to vector<16x32xf32>
      %c0_25 = arith.constant 0 : index
      %c0_26 = arith.constant 0 : index
      %38 = vector.load %arg10[%c0_25, %c0_26] : memref<16x32xf32, #tpu.memory_space<vmem>>, vector<16x32xf32>
      tpu.vector_store %arg10[%c0_25, %c0_26], %37 {strides = array<i32>} : memref<16x32xf32, #tpu.memory_space<vmem>>, vector<16x32xf32>,
      %c0_27 = arith.constant 0 : index
      %c0_28 = arith.constant 0 : index
      %39 = vector.load %arg2[%c0_27, %c0_28] : memref<16x32xbf16, #tpu.memory_space<vmem>>, vector<16x32xbf16>
      %40 = arith.extf %39 : vector<16x32xbf16> to vector<16x32xf32>
      %c0_29 = arith.constant 0 : index
      %c0_30 = arith.constant 0 : index
      %41 = vector.load %arg3[%c0_29, %c0_30] : memref<16x32xbf16, #tpu.memory_space<vmem>>, vector<16x32xbf16>
      %42 = arith.extf %41 : vector<16x32xbf16> to vector<16x32xf32>
      %c0_31 = arith.constant 0 : index
      %c0_32 = arith.constant 0 : index
      %43 = vector.load %arg4[%c0_31, %c0_32] : memref<1x32xf32, #tpu.memory_space<vmem>>, vector<1x32xf32>
      %c0_33 = arith.constant 0 : index
      %c0_34 = arith.constant 0 : index
      %44 = vector.load %arg5[%c0_33, %c0_34] : memref<1x32xf32, #tpu.memory_space<vmem>>, vector<1x32xf32>
      %45 = vector.broadcast %43 : vector<1x32xf32> to vector<16x32xf32>
      %46 = arith.mulf %40, %45 : vector<16x32xf32>
      %cst_35 = arith.constant 1.000000e+00 : f32
      %47 = vector.broadcast %cst_35 : f32 to vector<1x32xf32>
      %48 = arith.subf %47, %43 : vector<1x32xf32>
      %49 = vector.broadcast %48 : vector<1x32xf32> to vector<16x32xf32>
      %50 = arith.mulf %42, %49 : vector<16x32xf32>
      %51 = arith.addf %46, %50 : vector<16x32xf32>
      %52 = arith.truncf %51 : vector<16x32xf32> to vector<16x32xbf16>
      %c0_36 = arith.constant 0 : index
      %c0_37 = arith.constant 0 : index
      %53 = vector.load %arg11[%c0_36, %c0_37] : memref<16x32xbf16, #tpu.memory_space<vmem>>, vector<16x32xbf16>
      tpu.vector_store %arg11[%c0_36, %c0_37], %52 {strides = array<i32>} : memref<16x32xbf16, #tpu.memory_space<vmem>>, vector<16x32xbf16>,
      %54 = vector.broadcast %44 : vector<1x32xf32> to vector<16x32xf32>
      %55 = arith.mulf %40, %54 : vector<16x32xf32>
      %cst_38 = arith.constant 1.000000e+00 : f32
      %56 = vector.broadcast %cst_38 : f32 to vector<1x32xf32>
      %57 = arith.subf %56, %44 : vector<1x32xf32>
      %58 = vector.broadcast %57 : vector<1x32xf32> to vector<16x32xf32>
      %59 = arith.mulf %42, %58 : vector<16x32xf32>
      %60 = arith.addf %55, %59 : vector<16x32xf32>
      %61 = arith.truncf %60 : vector<16x32xf32> to vector<16x32xbf16>
      %c0_39 = arith.constant 0 : index
      %c0_40 = arith.constant 0 : index
      %62 = vector.load %arg12[%c0_39, %c0_40] : memref<16x32xbf16, #tpu.memory_space<vmem>>, vector<16x32xbf16>
      tpu.vector_store %arg12[%c0_39, %c0_40], %61 {strides = array<i32>} : memref<16x32xbf16, #tpu.memory_space<vmem>>, vector<16x32xbf16>,
    } else {
    }
    %c0 = arith.constant 0 : index
    %c0_1 = arith.constant 0 : index
    %3 = vector.load %arg11[%c0, %c0_1] : memref<16x32xbf16, #tpu.memory_space<vmem>>, vector<16x32xbf16>
    %c0_2 = arith.constant 0 : index
    %c0_3 = arith.constant 0 : index
    %4 = vector.load %arg6[%c0_2, %c0_3] : memref<32x64xbf16, #tpu.memory_space<vmem>>, vector<32x64xbf16>
    %cst = arith.constant dense<0.000000e+00> : vector<16x64xf32>
    %5 = tpu.matmul %3, %4, %cst {dimension_numbers = #tpu.dot_dimension_numbers<[1], [0], [0], [1], [0, 0, 1, 1], [], []>} : vector<16x32xbf16>, vector<32x64xbf16>, vector<16x64xf32> -> vector<16x64xf32>
    %c0_4 = arith.constant 0 : index
    %c0_5 = arith.constant 0 : index
    %6 = vector.load %arg12[%c0_4, %c0_5] : memref<16x32xbf16, #tpu.memory_space<vmem>>, vector<16x32xbf16>
    %c0_6 = arith.constant 0 : index
    %c0_7 = arith.constant 0 : index
    %7 = vector.load %arg7[%c0_6, %c0_7] : memref<32x64xbf16, #tpu.memory_space<vmem>>, vector<32x64xbf16>
    %cst_8 = arith.constant dense<0.000000e+00> : vector<16x64xf32>
    %8 = tpu.matmul %6, %7, %cst_8 {dimension_numbers = #tpu.dot_dimension_numbers<[1], [0], [0], [1], [0, 0, 1, 1], [], []>} : vector<16x32xbf16>, vector<32x64xbf16>, vector<16x64xf32> -> vector<16x64xf32>
    %cst_9 = arith.constant 2.000000e+01 : f32
    %9 = vector.broadcast %cst_9 : f32 to vector<16x64xf32>
    %10 = arith.minimumf %8, %9 : vector<16x64xf32>
    %11 = math.exp %10 : vector<16x64xf32>
    %cst_10 = arith.constant 1.000000e+00 : f32
    %12 = vector.broadcast %cst_10 : f32 to vector<16x64xf32>
    %13 = arith.addf %12, %11 : vector<16x64xf32>
    %cst_11 = arith.constant 1.000000e+00 : f32
    %14 = vector.broadcast %cst_11 : f32 to vector<16x64xf32>
    %15 = arith.addf %14, %11 : vector<16x64xf32>
    %16 = arith.mulf %13, %15 : vector<16x64xf32>
    %cst_12 = arith.constant 1.000000e+00 : f32
    %17 = vector.broadcast %cst_12 : f32 to vector<16x64xf32>
    %18 = arith.subf %16, %17 : vector<16x64xf32>
    %cst_13 = arith.constant 1.000000e+00 : f32
    %19 = vector.broadcast %cst_13 : f32 to vector<16x64xf32>
    %20 = arith.addf %16, %19 : vector<16x64xf32>
    %21 = tpu.reciprocal %20 {approx = true} : vector<16x64xf32> -> vector<16x64xf32>
    %22 = arith.mulf %18, %21 : vector<16x64xf32>
    %cst_14 = arith.constant 2.000000e+01 : f32
    %23 = vector.broadcast %cst_14 : f32 to vector<16x64xf32>
    %24 = arith.cmpf ogt, %8, %23 : vector<16x64xf32>
    %25 = arith.mulf %8, %22 : vector<16x64xf32>
    %26 = arith.select %24, %8, %25 : vector<16x64xi1>, vector<16x64xf32>
    %27 = arith.mulf %5, %26 : vector<16x64xf32>
    %28 = arith.truncf %27 : vector<16x64xf32> to vector<16x64xbf16>
    %c0_15 = arith.constant 0 : index
    %c0_16 = arith.constant 0 : index
    %29 = vector.load %arg10[%c0_15, %c0_16] : memref<16x32xf32, #tpu.memory_space<vmem>>, vector<16x32xf32>
    %c0_17 = arith.constant 0 : index
    %c0_18 = arith.constant 0 : index
    %30 = vector.load %arg8[%c0_17, %c0_18] : memref<64x32xbf16, #tpu.memory_space<vmem>>, vector<64x32xbf16>
    %cst_19 = arith.constant dense<0.000000e+00> : vector<16x32xf32>
    %31 = tpu.matmul %28, %30, %cst_19 {dimension_numbers = #tpu.dot_dimension_numbers<[1], [0], [0], [1], [0, 0, 1, 1], [], []>} : vector<16x64xbf16>, vector<64x32xbf16>, vector<16x32xf32> -> vector<16x32xf32>
    %32 = arith.addf %29, %31 : vector<16x32xf32>
    %c0_20 = arith.constant 0 : index
    %c0_21 = arith.constant 0 : index
    %33 = vector.load %arg10[%c0_20, %c0_21] : memref<16x32xf32, #tpu.memory_space<vmem>>, vector<16x32xf32>
    tpu.vector_store %arg10[%c0_20, %c0_21], %32 {strides = array<i32>} : memref<16x32xf32, #tpu.memory_space<vmem>>, vector<16x32xf32>,
    %c0_i32_22 = arith.constant 0 : i32
    %34 = arith.cmpi eq, %arg1, %c0_i32_22 : i32
    %35 = arith.extui %34 : i1 to i32
    %c0_i32_23 = arith.constant 0 : i32
    %36 = arith.cmpi ne, %35, %c0_i32_23 : i32
    scf.if %36 {
      %c0_24 = arith.constant 0 : index
      %c0_25 = arith.constant 0 : index
      %37 = vector.load %arg10[%c0_24, %c0_25] : memref<16x32xf32, #tpu.memory_space<vmem>>, vector<16x32xf32>
      %c0_26 = arith.constant 0 : index
      %c0_27 = arith.constant 0 : index
      %38 = vector.load %arg9[%c0_26, %c0_27] : memref<16x32xf32, #tpu.memory_space<vmem>>, vector<16x32xf32>
      tpu.vector_store %arg9[%c0_26, %c0_27], %37 {strides = array<i32>} : memref<16x32xf32, #tpu.memory_space<vmem>>, vector<16x32xf32>,
    } else {
    }
    return
  }
  func.func @transform_0(%arg0: i32, %arg1: i32) -> (i32, i32) {
    %c0_i32 = arith.constant 0 : i32
    %c0_i32_0 = arith.constant 0 : i32
    return %arg0, %c0_i32 : i32, i32
  }
  func.func @transform_1(%arg0: i32, %arg1: i32) -> (i32, i32) {
    %c0_i32 = arith.constant 0 : i32
    %c0_i32_0 = arith.constant 0 : i32
    return %arg0, %c0_i32 : i32, i32
  }
  func.func @transform_2(%arg0: i32, %arg1: i32) -> (i32, i32) {
    %c0_i32 = arith.constant 0 : i32
    %c0_i32_0 = arith.constant 0 : i32
    %c0_i32_1 = arith.constant 0 : i32
    return %c0_i32, %c0_i32_0 : i32, i32
  }
  func.func @transform_3(%arg0: i32, %arg1: i32) -> (i32, i32) {
    %c0_i32 = arith.constant 0 : i32
    %c0_i32_0 = arith.constant 0 : i32
    %c0_i32_1 = arith.constant 0 : i32
    return %c0_i32, %c0_i32_0 : i32, i32
  }
  func.func @transform_4(%arg0: i32, %arg1: i32) -> (i32, i32) {
    %c0_i32 = arith.constant 0 : i32
    %c0_i32_0 = arith.constant 0 : i32
    return %c0_i32, %arg1 : i32, i32
  }
  func.func @transform_5(%arg0: i32, %arg1: i32) -> (i32, i32) {
    %c0_i32 = arith.constant 0 : i32
    %c0_i32_0 = arith.constant 0 : i32
    return %c0_i32, %arg1 : i32, i32
  }
  func.func @transform_6(%arg0: i32, %arg1: i32) -> (i32, i32) {
    %c0_i32 = arith.constant 0 : i32
    %c0_i32_0 = arith.constant 0 : i32
    return %arg1, %c0_i32 : i32, i32
  }
  func.func @transform_7(%arg0: i32, %arg1: i32) -> (i32, i32) {
    %c0_i32 = arith.constant 0 : i32
    %c0_i32_0 = arith.constant 0 : i32
    return %arg0, %c0_i32 : i32, i32
  }
}

</mosaic_0001>

<llo_original>
// kernel: tpu_custom_call.1
$region0: #{tpu_custom_call.1}
  #allocation0 [shape = 'u32[]', space=smem, size = 0x4, offset = 0x4, fixed_abs, tag = 'smem constant byte address 0x4 - core index']
  #allocation1 [shape = 'u32[144,128]{1,0:T(1,128)}', space=vmem, size = 0x12000, scoped, tag = 'internal scratch']
  #allocation2 [shape = 'f32[16,32]{1,0:T(8,128)}', space=vmem, size = 0x2000, scoped, tag = 'scratch operand']
  #allocation3 [shape = 'bf16[16,32]{1,0:T(8,128)(2,1)}', space=vmem, size = 0x1000, scoped, tag = 'scratch operand']
  #allocation4 [shape = 'bf16[16,32]{1,0:T(8,128)(2,1)}', space=vmem, size = 0x1000, scoped, tag = 'scratch operand']
  %s0 = inlined_call_operand.vmem [shape: bf16[16,32], index: 0, kind: input, shape index: {}]
  %s1 = inlined_call_operand.vmem [shape: bf16[16,32], index: 1, kind: input, shape index: {}]
  %s2 = inlined_call_operand.vmem [shape: f32[1,32], index: 2, kind: input, shape index: {}]
  %s3 = inlined_call_operand.vmem [shape: f32[1,32], index: 3, kind: input, shape index: {}]
  %s4 = inlined_call_operand.vmem [shape: bf16[32,64], index: 4, kind: input, shape index: {}]
  %s5 = inlined_call_operand.vmem [shape: bf16[32,64], index: 5, kind: input, shape index: {}]
  %s6 = inlined_call_operand.vmem [shape: bf16[64,32], index: 6, kind: input, shape index: {}]
  %s7 = inlined_call_operand.hbm [shape: f32[16,32], index: 7, kind: output, shape index: {}]
  %s8 = sld [smem:[#allocation0]]
  $region46: #{tpu_custom_call.1} parent=0
    _
  %s10 = ssub.s32 1, %s8
  %s11 = scalar_select 0, %s10, %s8
  $region1: #{tpu_custom_call.1} parent=0
    #allocation5 [shape = 'u8[8192]{0}', space=vmem, size = 0x2000, scoped, tag = 'output window, operand 0, single buffered']
    #allocation6 [shape = 's32[1]{0}', space=sflag, size = 0x4, scoped, tag = 'scoped memory for tpu_custom_call.1']
    %12 = vsyncpa [#allocation6], 0
    // Predicated region
    $region2: #{tpu_custom_call.1} parent=1 // pred_check
      _
    $region3: #{tpu_custom_call.1} parent=1 // pred_check_branch
      %14 = sbr.rel (0) target = $region5
    $region4: #{tpu_custom_call.1} parent=1 // pred_region
      _
    $region5: #{tpu_custom_call.1} parent=1 // pred_fallthru
      _
    // Predicated region
    $region6: #{tpu_custom_call.1} parent=1 // pred_check
      _
    $region7: #{tpu_custom_call.1} parent=1 // pred_check_branch
      %16 = sbr.rel (0) target = $region9
    $region8: #{tpu_custom_call.1} parent=1 // pred_region
      _
    $region9: #{tpu_custom_call.1} parent=1 // pred_fallthru
      _
    // Predicated region
    $region10: #{tpu_custom_call.1} parent=1 // pred_check
      _
    $region11: #{tpu_custom_call.1} parent=1 // pred_check_branch
      %18 = sbr.rel (0) target = $region13
    $region12: #{tpu_custom_call.1} parent=1 // pred_region
      _
    $region13: #{tpu_custom_call.1} parent=1 // pred_fallthru
      _
    // Predicated region
    $region14: #{tpu_custom_call.1} parent=1 // pred_check
      _
    $region15: #{tpu_custom_call.1} parent=1 // pred_check_branch
      %20 = sbr.rel (0) target = $region17
    $region16: #{tpu_custom_call.1} parent=1 // pred_region
      _
    $region17: #{tpu_custom_call.1} parent=1 // pred_fallthru
      _
    // Predicated region
    $region18: #{tpu_custom_call.1} parent=1 // pred_check
      _
    $region19: #{tpu_custom_call.1} parent=1 // pred_check_branch
      %22 = sbr.rel (0) target = $region21
    $region20: #{tpu_custom_call.1} parent=1 // pred_region
      _
    $region21: #{tpu_custom_call.1} parent=1 // pred_fallthru
      _
    // Predicated region
    $region22: #{tpu_custom_call.1} parent=1 // pred_check
      _
    $region23: #{tpu_custom_call.1} parent=1 // pred_check_branch
      %24 = sbr.rel (0) target = $region25
    $region24: #{tpu_custom_call.1} parent=1 // pred_region
      _
    $region25: #{tpu_custom_call.1} parent=1 // pred_fallthru
      _
    // Predicated region
    $region26: #{tpu_custom_call.1} parent=1 // pred_check
      _
    $region27: #{tpu_custom_call.1} parent=1 // pred_check_branch
      %26 = sbr.rel (0) target = $region29
    $region28: #{tpu_custom_call.1} parent=1 // pred_region
      _
    $region29: #{tpu_custom_call.1} parent=1 // pred_fallthru
      _
    %p28 = scmp.eq.s32.totalorder 0, 0
    // Predicated region
    $region30: #{tpu_custom_call.1} parent=1 // pred_check
      %p29 = pneg %p28
    $region31: #{tpu_custom_call.1} parent=1 // pred_check_branch
      %31 = sbr.rel (%p29) target = $region33
    $region32: #{tpu_custom_call.1} parent=1 // pred_region
      %vm32 = vcmask 261120
      %33 = vst.msk [vmem:[#allocation2] sm:$0xff] %vm32, 0.0
      %34 = vst.msk [vmem:[#allocation2 + $0x8] sm:$0xff] %vm32, 0.0
      %v35 = vld [vmem:[%s0] sm:$0xf]
      %v36 = vld [vmem:[%s0 + $0x4] sm:$0xf]
      %v37 = vunpack.c.l.bf16 %v35
      %v38 = vunpack.c.l.bf16 %v36
      %v39 = vld [vmem:[%s1] sm:$0xf]
      %v40 = vld [vmem:[%s1 + $0x4] sm:$0xf]
      %v41 = vunpack.c.l.bf16 %v39
      %v42 = vunpack.c.l.bf16 %v40
      %v43 = vld [vmem:[%s2] sm:$0x1]
      %v44 = vld [vmem:[%s3] sm:$0x1]
      %v46 = vlaneseq
      %v47 = vshrl.u32 %v46, 7
      %v48 = vsub.s32 0, %v47
      %v49 = vrot.slane %v43, %v48
      %v51 = vmul.f32 %v37, %v49
      %v52 = vmul.f32 %v38, %v49
      %v53 = vsub.f32 1.0, %v43
      %v55 = vlaneseq
      %v56 = vshrl.u32 %v55, 7
      %v57 = vsub.s32 0, %v56
      %v58 = vrot.slane %v53, %v57
      %v60 = vmul.f32 %v41, %v58
      %v61 = vmul.f32 %v42, %v58
      %v62 = vadd.f32 %v51, %v60
      %v63 = vadd.f32 %v52, %v61
      %v64 = vpack.c.bf16 %v63, %v62
      %v66 = vunpack.c.l.b16 %v64
      %v67 = vunpack.c.h.b16 %v64
      %v68 = vpack.c.b16 %v66, %v66
      %v69 = vpack.c.b16 %v67, %v67
      %vm72 = vcmask 257024
      %73 = vst.msk [vmem:[#allocation3] sm:$0xf] %vm72, %v68
      %74 = vst.msk [vmem:[#allocation3 + $0x4] sm:$0xf] %vm72, %v69
      %v76 = vlaneseq
      %v77 = vshrl.u32 %v76, 7
      %v78 = vsub.s32 0, %v77
      %v79 = vrot.slane %v44, %v78
      %v81 = vmul.f32 %v37, %v79
      %v82 = vmul.f32 %v38, %v79
      %v83 = vsub.f32 1.0, %v44
      %v85 = vlaneseq
      %v86 = vshrl.u32 %v85, 7
      %v87 = vsub.s32 0, %v86
      %v88 = vrot.slane %v83, %v87
      %v90 = vmul.f32 %v41, %v88
      %v91 = vmul.f32 %v42, %v88
      %v92 = vadd.f32 %v81, %v90
      %v93 = vadd.f32 %v82, %v91
      %v94 = vpack.c.bf16 %v93, %v92
      %v96 = vunpack.c.l.b16 %v94
      %v97 = vunpack.c.h.b16 %v94
      %v98 = vpack.c.b16 %v96, %v96
      %v99 = vpack.c.b16 %v97, %v97
      %102 = vst.msk [vmem:[#allocation4] sm:$0xf] %vm72, %v98
      %103 = vst.msk [vmem:[#allocation4 + $0x4] sm:$0xf] %vm72, %v99
    $region33: #{tpu_custom_call.1} parent=1 // pred_fallthru
      _
    %v104 = vld [vmem:[#allocation3] sm:$0xf]
    %v105 = vld [vmem:[#allocation3 + $0x4] sm:$0xf]
    %v106 = vld [vmem:[%s4] sm:$0xf]
    %v107 = vld [vmem:[%s4 + $0x4] sm:$0xf]
    %v108 = vld [vmem:[%s4 + $0x8] sm:$0xf]
    %v109 = vld [vmem:[%s4 + $0xc] sm:$0xf]
    %v112 = vunpack.c.l.b16 %v104
    %v113 = vunpack.c.l.b16 %v105
    %v114 = vpack.c.b16 %v113, %v112
    %v119 = vunpack.c.l.b16 %v106
    %v120 = vunpack.c.l.b16 %v107
    %v121 = vunpack.c.l.b16 %v108
    %v122 = vunpack.c.l.b16 %v109
    %v123 = vpack.c.b16 %v120, %v119
    %v124 = vpack.c.b16 %v122, %v121
    %vm127 = vcmask 261120
    %v129 = vsel %vm127, %v114, 0
    %131 = vmatprep.subr.bf16.mxu0 0
    %132 = vmatpush1.bf16.msra.mxu0 0
    %133 = vmatprep.subr.bf16.mxu0 0
    %134 = vmatpush1.bf16.msra.mxu0 0
    %135 = vmatprep.subr.bf16.mxu0 0
    %136 = vmatpush1.bf16.msra.mxu0 0
    %137 = vmatprep.subr.bf16.mxu0 0
    %138 = vmatpush1.bf16.msra.mxu0 0
    %139 = vmatprep.subr.bf16.mxu0 0
    %140 = vmatpush1.bf16.msra.mxu0 0
    %141 = vmatprep.subr.bf16.mxu0 0
    %142 = vmatpush1.bf16.msra.mxu0 0
    %143 = vmatprep.subr.bf16.mxu0 0
    %144 = vmatpush1.bf16.msra.mxu0 %v124
    %145 = vmatprep.subr.bf16.mxu0 0
    %146 = vmatpush1.bf16.msra.mxu0 %v123
    %147 = vmatprep.subr.bf16.mxu0 0
    %148 = vmatpush2.bf16.msra.mxu0 0
    %149 = vmatprep.subr.bf16.mxu0 0
    %150 = vmatpush2.bf16.msra.mxu0 0
    %151 = vmatprep.subr.bf16.mxu0 0
    %152 = vmatpush2.bf16.msra.mxu0 0
    %153 = vmatprep.subr.bf16.mxu0 0
    %154 = vmatpush2.bf16.msra.mxu0 0
    %155 = vmatprep.subr.bf16.mxu0 0
    %156 = vmatpush2.bf16.msra.mxu0 0
    %157 = vmatprep.subr.bf16.mxu0 0
    %158 = vmatpush2.bf16.msra.mxu0 0
    %159 = vmatprep.subr.bf16.mxu0 0
    %160 = vmatpush2.bf16.msra.mxu0 0
    %161 = vmatprep.subr.bf16.mxu0 0
    %162 = vmatpush2.bf16.msra.mxu0 0
    %163 = vmatprep.mubr.bf16.mxu0 0
    %164 = vmatmul.mubr.bf16.gmra.mxu0 %v129
    %v165 = vpop.f32.mrf.mxu0
    %v166 = vadd.f32 0.0, %v165
    %v167 = vpop.f32.mrf.mxu0
    %v168 = vpop.f32.mrf.mxu0
    %v169 = vadd.f32 0.0, %v168
    %v170 = vpop.f32.mrf.mxu0
    %171 = vdwg.mxu0
    %v172 = vld [vmem:[#allocation4] sm:$0xf]
    %v173 = vld [vmem:[#allocation4 + $0x4] sm:$0xf]
    %v174 = vld [vmem:[%s5] sm:$0xf]
    %v175 = vld [vmem:[%s5 + $0x4] sm:$0xf]
    %v176 = vld [vmem:[%s5 + $0x8] sm:$0xf]
    %v177 = vld [vmem:[%s5 + $0xc] sm:$0xf]
    %v180 = vunpack.c.l.b16 %v172
    %v181 = vunpack.c.l.b16 %v173
    %v182 = vpack.c.b16 %v181, %v180
    %v187 = vunpack.c.l.b16 %v174
    %v188 = vunpack.c.l.b16 %v175
    %v189 = vunpack.c.l.b16 %v176
    %v190 = vunpack.c.l.b16 %v177
    %v191 = vpack.c.b16 %v188, %v187
    %v192 = vpack.c.b16 %v190, %v189
    %v196 = vsel %vm127, %v182, 0
    %198 = vmatprep.subr.bf16.mxu0 0
    %199 = vmatpush1.bf16.msra.mxu0 0
    %200 = vmatprep.subr.bf16.mxu0 0
    %201 = vmatpush1.bf16.msra.mxu0 0
    %202 = vmatprep.subr.bf16.mxu0 0
    %203 = vmatpush1.bf16.msra.mxu0 0
    %204 = vmatprep.subr.bf16.mxu0 0
    %205 = vmatpush1.bf16.msra.mxu0 0
    %206 = vmatprep.subr.bf16.mxu0 0
    %207 = vmatpush1.bf16.msra.mxu0 0
    %208 = vmatprep.subr.bf16.mxu0 0
    %209 = vmatpush1.bf16.msra.mxu0 0
    %210 = vmatprep.subr.bf16.mxu0 0
    %211 = vmatpush1.bf16.msra.mxu0 %v192
    %212 = vmatprep.subr.bf16.mxu0 0
    %213 = vmatpush1.bf16.msra.mxu0 %v191
    %214 = vmatprep.subr.bf16.mxu0 0
    %215 = vmatpush2.bf16.msra.mxu0 0
    %216 = vmatprep.subr.bf16.mxu0 0
    %217 = vmatpush2.bf16.msra.mxu0 0
    %218 = vmatprep.subr.bf16.mxu0 0
    %219 = vmatpush2.bf16.msra.mxu0 0
    %220 = vmatprep.subr.bf16.mxu0 0
    %221 = vmatpush2.bf16.msra.mxu0 0
    %222 = vmatprep.subr.bf16.mxu0 0
    %223 = vmatpush2.bf16.msra.mxu0 0
    %224 = vmatprep.subr.bf16.mxu0 0
    %225 = vmatpush2.bf16.msra.mxu0 0
    %226 = vmatprep.subr.bf16.mxu0 0
    %227 = vmatpush2.bf16.msra.mxu0 0
    %228 = vmatprep.subr.bf16.mxu0 0
    %229 = vmatpush2.bf16.msra.mxu0 0
    %230 = vmatprep.mubr.bf16.mxu0 0
    %231 = vmatmul.mubr.bf16.gmra.mxu0 %v196
    %v232 = vpop.f32.mrf.mxu0
    %v233 = vadd.f32 0.0, %v232
    %v234 = vpop.f32.mrf.mxu0
    %v235 = vpop.f32.mrf.mxu0
    %v236 = vadd.f32 0.0, %v235
    %v237 = vpop.f32.mrf.mxu0
    %238 = vdwg.mxu0
    %v239 = vmin.f32 %v233, 20.0
    %v240 = vmin.f32 %v236, 20.0
    %v241 = vmul.f32 %v239, 1.442695
    %v242 = vpow.pop %v241
    %v243 = vmul.f32 %v240, 1.442695
    %v244 = vpow.pop %v243
    %v245 = vadd.f32 %v242, 1.0
    %v246 = vadd.f32 %v244, 1.0
    %v247 = vmul.f32 %v245, %v245
    %v248 = vmul.f32 %v246, %v246
    %v249 = vsub.f32 %v247, 1.0
    %v250 = vsub.f32 %v248, 1.0
    %v251 = vadd.f32 %v247, 1.0
    %v252 = vadd.f32 %v248, 1.0
    %v253 = vrcp.pop %v251
    %v254 = vrcp.pop %v252
    %v255 = vmul.f32 %v249, %v253
    %v256 = vmul.f32 %v250, %v254
    %vm257 = vcmp.gt.f32.partialorder %v233, 20.0
    %vm258 = vcmp.gt.f32.partialorder %v236, 20.0
    %v259 = vmul.f32 %v233, %v255
    %v260 = vmul.f32 %v236, %v256
    %v261 = vsel %vm257, %v233, %v259
    %v262 = vsel %vm258, %v236, %v260
    %v263 = vmul.f32 %v166, %v261
    %v264 = vmul.f32 %v169, %v262
    %v265 = vpack.c.bf16 %v264, %v263
    %v266 = vld [vmem:[#allocation2] sm:$0xff]
    %v267 = vld [vmem:[#allocation2 + $0x8] sm:$0xff]
    %v268 = vld [vmem:[%s6] sm:$0xf]
    %v269 = vld [vmem:[%s6 + $0x4] sm:$0xf]
    %v270 = vld [vmem:[%s6 + $0x8] sm:$0xf]
    %v271 = vld [vmem:[%s6 + $0xc] sm:$0xf]
    %v272 = vld [vmem:[%s6 + $0x10] sm:$0xf]
    %v273 = vld [vmem:[%s6 + $0x14] sm:$0xf]
    %v274 = vld [vmem:[%s6 + $0x18] sm:$0xf]
    %v275 = vld [vmem:[%s6 + $0x1c] sm:$0xf]
    %v284 = vunpack.c.l.b16 %v268
    %v285 = vunpack.c.l.b16 %v269
    %v286 = vunpack.c.l.b16 %v270
    %v287 = vunpack.c.l.b16 %v271
    %v288 = vunpack.c.l.b16 %v272
    %v289 = vunpack.c.l.b16 %v273
    %v290 = vunpack.c.l.b16 %v274
    %v291 = vunpack.c.l.b16 %v275
    %v292 = vpack.c.b16 %v285, %v284
    %v293 = vpack.c.b16 %v287, %v286
    %v294 = vpack.c.b16 %v289, %v288
    %v295 = vpack.c.b16 %v291, %v290
    %vm300 = vcmask 523264
    %v302 = vsel %vm300, %v265, 0
    %304 = vmatprep.subr.bf16.mxu0 0
    %305 = vmatpush1.bf16.msra.mxu0 0
    %306 = vmatprep.subr.bf16.mxu0 0
    %307 = vmatpush1.bf16.msra.mxu0 0
    %308 = vmatprep.subr.bf16.mxu0 0
    %309 = vmatpush1.bf16.msra.mxu0 0
    %310 = vmatprep.subr.bf16.mxu0 0
    %311 = vmatpush1.bf16.msra.mxu0 0
    %312 = vmatprep.subr.bf16.mxu0 0
    %313 = vmatpush1.bf16.msra.mxu0 %v295
    %314 = vmatprep.subr.bf16.mxu0 0
    %315 = vmatpush1.bf16.msra.mxu0 %v294
    %316 = vmatprep.subr.bf16.mxu0 0
    %317 = vmatpush1.bf16.msra.mxu0 %v293
    %318 = vmatprep.subr.bf16.mxu0 0
    %319 = vmatpush1.bf16.msra.mxu0 %v292
    %320 = vmatprep.subr.bf16.mxu0 0
    %321 = vmatpush2.bf16.msra.mxu0 0
    %322 = vmatprep.subr.bf16.mxu0 0
    %323 = vmatpush2.bf16.msra.mxu0 0
    %324 = vmatprep.subr.bf16.mxu0 0
    %325 = vmatpush2.bf16.msra.mxu0 0
    %326 = vmatprep.subr.bf16.mxu0 0
    %327 = vmatpush2.bf16.msra.mxu0 0
    %328 = vmatprep.subr.bf16.mxu0 0
    %329 = vmatpush2.bf16.msra.mxu0 0
    %330 = vmatprep.subr.bf16.mxu0 0
    %331 = vmatpush2.bf16.msra.mxu0 0
    %332 = vmatprep.subr.bf16.mxu0 0
    %333 = vmatpush2.bf16.msra.mxu0 0
    %334 = vmatprep.subr.bf16.mxu0 0
    %335 = vmatpush2.bf16.msra.mxu0 0
    %336 = vmatprep.mubr.bf16.mxu0 0
    %337 = vmatmul.mubr.bf16.gmra.mxu0 %v302
    %v338 = vpop.f32.mrf.mxu0
    %v339 = vadd.f32 0.0, %v338
    %v340 = vpop.f32.mrf.mxu0
    %v341 = vpop.f32.mrf.mxu0
    %v342 = vadd.f32 0.0, %v341
    %v343 = vpop.f32.mrf.mxu0
    %344 = vdwg.mxu0
    %v345 = vadd.f32 %v266, %v339
    %v346 = vadd.f32 %v267, %v342
    %347 = vst.msk [vmem:[#allocation2] sm:$0xff] %vm127, %v345
    %348 = vst.msk [vmem:[#allocation2 + $0x8] sm:$0xff] %vm127, %v346
    // Predicated region
    $region34: #{tpu_custom_call.1} parent=1 // pred_check
      %p349 = pneg %p28
    $region35: #{tpu_custom_call.1} parent=1 // pred_check_branch
      %351 = sbr.rel (%p349) target = $region37
    $region36: #{tpu_custom_call.1} parent=1 // pred_region
      %v352 = vld [vmem:[#allocation2] sm:$0xff]
      %v353 = vld [vmem:[#allocation2 + $0x8] sm:$0xff]
      %354 = vst.msk [vmem:[#allocation5] sm:$0xff] %vm127, %v352
      %355 = vst.msk [vmem:[#allocation5 + $0x8] sm:$0xff] %vm127, %v353
    $region37: #{tpu_custom_call.1} parent=1 // pred_fallthru
      _
    // Predicated region
    $region38: #{tpu_custom_call.1} parent=1 // pred_check
      _
    $region39: #{tpu_custom_call.1} parent=1 // pred_check_branch
      %357 = sbr.rel (0) target = $region41
    $region40: #{tpu_custom_call.1} parent=1 // pred_region
      %s359 = ssub.s32 256, 256
      %360 = vsyncadd [#allocation6], %s359
      %s361 = sshll.u32 [#allocation5], 4
      %s362 = int_to_ptr.vmem [resolvable:$true] %s361
      %367 = dma.vmem_to_hbm [thread:$0]  %s362, 256, %s7, [#allocation6], 128, 128, 8
    $region41: #{tpu_custom_call.1} parent=1 // pred_fallthru
      _
    // Predicated region
    $region42: #{tpu_custom_call.1} parent=1 // pred_check
      _
    $region43: #{tpu_custom_call.1} parent=1 // pred_check_branch
      %369 = sbr.rel (0) target = $region45
    $region44: #{tpu_custom_call.1} parent=1 // pred_region
      %370 = dma.done [#allocation6], 256
    $region45: #{tpu_custom_call.1} parent=1 // pred_fallthru
      _
    %371 = vsyncpa [#allocation6], 1

</llo_original>
